<compile_context>
chip_gen: v6e
topology: v6e:2x2x1
jax: 0.10.0
libtpu: 0.0.40
codegen_flags: <defaults>
</compile_context>

<pallas_src>
import jax
import jax.numpy as jnp
from jax.experimental import pallas as pl
from jax.experimental.pallas import tpu as pltpu


def _round_up(v: int, m: int) -> int:
    return (v + m - 1) // m * m


_VMEM_PLAN_BUDGET = 44 << 20   # conservative planning budget (v7x: 64 MiB physical)
_VMEM_LIMIT_CAP = 56 << 20     # never ask for more scoped VMEM than fits v7x


def _make_gcn_kernel(apply_proj: bool, feat_resident: bool, block: int):
    """Build the kernel body.

    apply_proj=True : aggregate the (pre-scaled) X and project with W in finalize.
    apply_proj=False: features were pre-projected (X @ W, then d_inv scaled) in
                      the wrapper because F_out < F_in; only bias in finalize
                      and W is not passed to the kernel at all.
    """

    def body(adj_ref, feat_ref, dinv_ref, w_ref, b_ref, o_ref, acc_ref):
        i = pl.program_id(0)          # output row block       ("parallel")
        k = pl.program_id(1)          # contraction col block  ("arbitrary")

        # ---- init accumulator at the first contraction step -----------------
        @pl.when(k == 0)
        def _init():
            acc_ref[...] = jnp.zeros_like(acc_ref)

        # ---- features for contraction block k (already d_inv-scaled, bf16) --
        if feat_resident:
            start = pl.multiple_of(k * block, block)
            feat_blk = feat_ref[pl.ds(start, block), :]
        else:
            feat_blk = feat_ref[...]

        # ---- acc += A[i,k] @ y   (int8 0/1 adjacency -> exact bf16, f32 acc) -
        a_tile = adj_ref[...].astype(jnp.bfloat16)
        acc_ref[...] += jnp.dot(a_tile, feat_blk,
                                preferred_element_type=jnp.float32)

        # ---- '+ I' term of A_hat = A + I: add y on the diagonal block --------
        @pl.when(k == i)
        def _identity_term():
            acc_ref[...] += feat_blk.astype(jnp.float32)

        # ---- finalize: output-row d_inv scale, projection, bias (last k) -----
        @pl.when(k == pl.num_programs(1) - 1)
        def _finalize():
            agg = acc_ref[...] * dinv_ref[...]
            if apply_proj:
                out = jnp.dot(agg.astype(jnp.bfloat16), w_ref[...],
                              preferred_element_type=jnp.float32)
            else:
                out = agg
            o_ref[...] = (out + b_ref[...]).astype(o_ref.dtype)

    if apply_proj:
        return body

    def kernel_no_w(adj_ref, feat_ref, dinv_ref, b_ref, o_ref, acc_ref):
        return body(adj_ref, feat_ref, dinv_ref, None, b_ref, o_ref, acc_ref)

    return kernel_no_w


def gcn_layer(adj, x, w, b, *, block: int = 512):
    """Pallas GCN layer. adj: (N,N), x: (N,F_in), w: (F_in,F_out), b: (F_out,)."""
    n = adj.shape[0]
    f_in, f_out = w.shape

    adj = adj.astype(jnp.float32)
    x = x.astype(jnp.float32)
    w = w.astype(jnp.float32)
    b = b.astype(jnp.float32)

    # d_inv = (colsum(A) + 1) ** -0.5 : tiny one-off reduce done in the wrapper.
    deg = jnp.sum(adj, axis=0) + 1.0              # column sums of A_hat = A + I
    d_inv = jax.lax.rsqrt(deg).reshape(n, 1)      # deg >= 1, never zero

    # ---- tiling --------------------------------------------------------------
    blk = max(128, _round_up(min(block, n), 128))             # (8,128)-legal tile
    # v7x megacore: keep >= 2 row blocks on the "parallel" axis when N allows it.
    if n > 128 and _round_up(n, blk) // blk < 2:
        blk = max(128, _round_up(-(-n // 2), 128))
    n_pad = _round_up(n, blk)
    g = n_pad // blk
    pad_n = n_pad - n
    f_out_pad = _round_up(f_out, 128)                          # lane-dense output

    # Matmul ordering: the N^2 * width term dominates, so aggregate the narrower
    # feature matrix. If F_out < F_in, project first and aggregate d_inv*(X @ W).
    # Either way the streamed features are pre-scaled by d_inv and stored bf16
    # (precision already bounded by the bf16 MXU operands).
    apply_proj = f_in <= f_out
    if apply_proj:
        f_w_pad = _round_up(f_in, 128)                         # lane-dense acc
        feat = d_inv * x                                       # (n, f_in) f32
        feat_p = jnp.pad(feat, ((0, pad_n), (0, f_w_pad - f_in))
                         ).astype(jnp.bfloat16)
        w_p = jnp.pad(w, ((0, f_w_pad - f_in), (0, f_out_pad - f_out))
                      ).astype(jnp.bfloat16)
    else:
        f_w_pad = f_out_pad
        w_full = jnp.pad(w, ((0, 0), (0, f_out_pad - f_out)))
        feat = d_inv * (x @ w_full)                            # (n, f_out_pad) f32
        feat_p = jnp.pad(feat, ((0, pad_n), (0, 0))).astype(jnp.bfloat16)
        w_p = None                                             # W never enters kernel

    adj_p = jnp.pad(adj.astype(jnp.int8), ((0, pad_n), (0, pad_n)))  # 1 B/elem
    dinv_p = jnp.pad(d_inv, ((0, pad_n), (0, 0)), constant_values=1.0)
    b_p = jnp.pad(b.reshape(1, f_out), ((0, 0), (0, f_out_pad - f_out)))

    # ---- VMEM planning: resident vs streamed features, explicit limit --------
    fixed_vmem = (2 * blk * blk                    # int8 adjacency, double-buffered
                  + 2 * blk * 128 * 4              # d_inv blocks (lane padded)
                  + 2 * 8 * f_out_pad * 4          # bias
                  + 2 * blk * f_out_pad * 4        # output blocks
                  + blk * f_w_pad * 4)             # f32 accumulator scratch
    if apply_proj:
        fixed_vmem += 2 * f_w_pad * f_out_pad * 2  # resident bf16 W
    feat_resident_vmem = 2 * n_pad * f_w_pad * 2
    feat_stream_vmem = 2 * blk * f_w_pad * 2
    feat_resident = fixed_vmem + feat_resident_vmem <= _VMEM_PLAN_BUDGET
    vmem_needed = fixed_vmem + (feat_resident_vmem if feat_resident
                                else feat_stream_vmem)
    vmem_limit = int(min(max(2 * vmem_needed, 32 << 20), _VMEM_LIMIT_CAP))

    if feat_resident:
        feat_spec = pl.BlockSpec((n_pad, f_w_pad), lambda i, k: (0, 0))
    else:
        feat_spec = pl.BlockSpec((blk, f_w_pad), lambda i, k: (k, 0))

    in_specs = [
        pl.BlockSpec((blk, blk), lambda i, k: (i, k)),      # int8 adjacency tile
        feat_spec,                                          # bf16 scaled features
        pl.BlockSpec((blk, 1), lambda i, k: (i, 0)),        # d_inv for output rows
    ]
    inputs = [adj_p, feat_p, dinv_p]
    if apply_proj:
        in_specs.append(pl.BlockSpec((f_w_pad, f_out_pad), lambda i, k: (0, 0)))
        inputs.append(w_p)
    in_specs.append(pl.BlockSpec((1, f_out_pad), lambda i, k: (0, 0)))
    inputs.append(b_p)

    flops = 2 * n_pad * n_pad * f_w_pad
    if apply_proj:
        flops += 2 * n_pad * f_w_pad * f_out_pad
    bytes_accessed = (n_pad * n_pad                                    # int8 adj
                      + (1 if feat_resident else g) * n_pad * f_w_pad * 2
                      + n_pad * 4                                      # d_inv
                      + (f_w_pad * f_out_pad * 2 if apply_proj else 0)
                      + f_out_pad * 4
                      + n_pad * f_out_pad * 4)

    out_pad = pl.pallas_call(
        _make_gcn_kernel(apply_proj, feat_resident, blk),
        out_shape=jax.ShapeDtypeStruct((n_pad, f_out_pad), jnp.float32),
        grid_spec=pltpu.PrefetchScalarGridSpec(
            num_scalar_prefetch=0,
            grid=(g, g),
            in_specs=in_specs,
            out_specs=pl.BlockSpec((blk, f_out_pad), lambda i, k: (i, 0)),
            scratch_shapes=[pltpu.VMEM((blk, f_w_pad), jnp.float32)],
        ),
        compiler_params=pltpu.CompilerParams(
            dimension_semantics=("parallel", "arbitrary"),
            vmem_limit_bytes=vmem_limit),
        cost_estimate=pl.CostEstimate(
            flops=flops, transcendentals=0, bytes_accessed=bytes_accessed),
    )(*inputs)

    return out_pad[:n, :f_out]


def gcn_ref(adj, x, w, b):
    """Pure-JAX f32 reference matching the PyTorch forward exactly."""
    # TODO(synk): the original forward's `print(D.shape)` host-side debug print
    # has no in-kernel equivalent and is intentionally omitted.
    n = adj.shape[0]
    a_hat = adj.astype(jnp.float32) + jnp.eye(n, dtype=jnp.float32)
    deg = jnp.sum(a_hat, axis=0)
    d_inv = 1.0 / jnp.sqrt(deg)
    a_norm = d_inv[:, None] * a_hat * d_inv[None, :]
    return a_norm @ x.astype(jnp.float32) @ w.astype(jnp.float32) + b.astype(jnp.float32)


def _make_inputs(key, n, f_in, f_out, density=0.3):
    k_adj, k_x, k_w, k_b = jax.random.split(key, 4)
    # Deterministic synthetic undirected 0/1 adjacency (zero diagonal).
    raw = (jax.random.uniform(k_adj, (n, n)) < density).astype(jnp.float32)
    adj = jnp.clip(raw + raw.T, 0.0, 1.0) * (1.0 - jnp.eye(n, dtype=jnp.float32))
    x = jax.random.uniform(k_x, (n, f_in), dtype=jnp.float32)
    # Parameters: torch.rand -> uniform [0, 1)
    w = jax.random.uniform(k_w, (f_in, f_out), dtype=jnp.float32)
    b = jax.random.uniform(k_b, (f_out,), dtype=jnp.float32)
    return adj, x, w, b


if __name__ == "__main__":
    key = jax.random.PRNGKey(0)
    k1, k2 = jax.random.split(key)

    # Case 1: aggregate-first path (F_in <= F_out), explicit block=128 -> 3x3
    # grid; exercises the K accumulator, the '+I' diagonal branch, lane padding.
    adj, x, w, b = _make_inputs(k1, 384, 64, 96)
    out = jax.block_until_ready(gcn_layer(adj, x, w, b, block=128))
    ref = gcn_ref(adj, x, w, b)
    assert out.shape == (384, 96)
    err1 = jnp.max(jnp.abs(out - ref))
    assert jnp.allclose(out, ref, rtol=2e-2, atol=2e-2), (
        f"case1 mismatch vs reference, max abs err = {err1}")

    # Case 2: project-first path (F_out < F_in, W stays out of the kernel),
    # default block -> megacore heuristic gives a 2x2 grid.
    adj, x, w, b = _make_inputs(k2, 256, 160, 64)
    out = jax.block_until_ready(gcn_layer(adj, x, w, b))
    ref = gcn_ref(adj, x, w, b)
    assert out.shape == (256, 64)
    err2 = jnp.max(jnp.abs(out - ref))
    assert jnp.allclose(out, ref, rtol=2e-2, atol=2e-2), (
        f"case2 mismatch vs reference, max abs err = {err2}")

    print("KERNEL_OK")
</pallas_src>

<mosaic_0001>
module attributes {stable_mosaic.version = 11 : i64} {
  func.func @body(%arg0: i32, %arg1: i32, %arg2: memref<128x128xi8, #tpu.memory_space<vmem>>, %arg3: memref<384x128xbf16, #tpu.memory_space<vmem>>, %arg4: memref<128x1xf32, #tpu.memory_space<vmem>>, %arg5: memref<128x128xbf16, #tpu.memory_space<vmem>>, %arg6: memref<1x128xf32, #tpu.memory_space<vmem>>, %arg7: memref<128x128xf32, #tpu.memory_space<vmem>>, %arg8: memref<128x128xf32, #tpu.memory_space<vmem>>) attributes {dimension_semantics = [#tpu.dimension_semantics<parallel>, #tpu.dimension_semantics<arbitrary>], iteration_bounds = array<i64: 3, 3>, scalar_prefetch = 0 : i64, scratch_operands = 1 : i64, tpu.core_type = #tpu.core_type<tc>, window_params = [{transform_indices = @transform_0, window_bounds = array<i64: 128, 128>}, {pipeline_mode = #tpu.pipeline_mode<synchronous>, transform_indices = @transform_1, window_bounds = array<i64: 384, 128>}, {transform_indices = @transform_2, window_bounds = array<i64: 128, 1>}, {pipeline_mode = #tpu.pipeline_mode<synchronous>, transform_indices = @transform_3, window_bounds = array<i64: 128, 128>}, {pipeline_mode = #tpu.pipeline_mode<synchronous>, transform_indices = @transform_4, window_bounds = array<i64: 1, 128>}, {transform_indices = @transform_5, window_bounds = array<i64: 128, 128>}]} {
    %c0_i32 = arith.constant 0 : i32
    %0 = arith.cmpi eq, %arg1, %c0_i32 : i32
    %1 = arith.extui %0 : i1 to i32
    %c0_i32_0 = arith.constant 0 : i32
    %2 = arith.cmpi ne, %1, %c0_i32_0 : i32
    scf.if %2 {
      %cst_9 = arith.constant 0.000000e+00 : f32
      %19 = vector.broadcast %cst_9 : f32 to vector<128x128xf32>
      %c0_10 = arith.constant 0 : index
      %c0_11 = arith.constant 0 : index
      %20 = vector.load %arg8[%c0_10, %c0_11] : memref<128x128xf32, #tpu.memory_space<vmem>>, vector<128x128xf32>
      tpu.vector_store %arg8[%c0_10, %c0_11], %19 {strides = array<i32>} : memref<128x128xf32, #tpu.memory_space<vmem>>, vector<128x128xf32>,
    } else {
    }
    %c128_i32 = arith.constant 128 : i32
    %3 = arith.muli %arg1, %c128_i32 : i32
    %4 = tpu.assume_multiple %3, 128 : i32
    %5 = arith.index_cast %4 : i32 to index
    %c0 = arith.constant 0 : index
    %6 = vector.load %arg3[%5, %c0] : memref<384x128xbf16, #tpu.memory_space<vmem>>, vector<128x128xbf16>
    %c0_1 = arith.constant 0 : index
    %c0_2 = arith.constant 0 : index
    %7 = vector.load %arg2[%c0_1, %c0_2] : memref<128x128xi8, #tpu.memory_space<vmem>>, vector<128x128xi8>
    %8 = arith.sitofp %7 : vector<128x128xi8> to vector<128x128xbf16>
    %c0_3 = arith.constant 0 : index
    %c0_4 = arith.constant 0 : index
    %9 = vector.load %arg8[%c0_3, %c0_4] : memref<128x128xf32, #tpu.memory_space<vmem>>, vector<128x128xf32>
    %cst = arith.constant dense<0.000000e+00> : vector<128x128xf32>
    %10 = tpu.matmul %8, %6, %cst {dimension_numbers = #tpu.dot_dimension_numbers<[1], [0], [0], [1], [0, 0, 1, 1], [], []>} : vector<128x128xbf16>, vector<128x128xbf16>, vector<128x128xf32> -> vector<128x128xf32>
    %11 = arith.addf %9, %10 : vector<128x128xf32>
    %c0_5 = arith.constant 0 : index
    %c0_6 = arith.constant 0 : index
    %12 = vector.load %arg8[%c0_5, %c0_6] : memref<128x128xf32, #tpu.memory_space<vmem>>, vector<128x128xf32>
    tpu.vector_store %arg8[%c0_5, %c0_6], %11 {strides = array<i32>} : memref<128x128xf32, #tpu.memory_space<vmem>>, vector<128x128xf32>,
    %13 = arith.cmpi eq, %arg1, %arg0 : i32
    %14 = arith.extui %13 : i1 to i32
    %c0_i32_7 = arith.constant 0 : i32
    %15 = arith.cmpi ne, %14, %c0_i32_7 : i32
    scf.if %15 {
      %c0_9 = arith.constant 0 : index
      %c0_10 = arith.constant 0 : index
      %19 = vector.load %arg8[%c0_9, %c0_10] : memref<128x128xf32, #tpu.memory_space<vmem>>, vector<128x128xf32>
      %20 = arith.extf %6 : vector<128x128xbf16> to vector<128x128xf32>
      %21 = arith.addf %19, %20 : vector<128x128xf32>
      %c0_11 = arith.constant 0 : index
      %c0_12 = arith.constant 0 : index
      %22 = vector.load %arg8[%c0_11, %c0_12] : memref<128x128xf32, #tpu.memory_space<vmem>>, vector<128x128xf32>
      tpu.vector_store %arg8[%c0_11, %c0_12], %21 {strides = array<i32>} : memref<128x128xf32, #tpu.memory_space<vmem>>, vector<128x128xf32>,
    } else {
    }
    %c2_i32 = arith.constant 2 : i32
    %16 = arith.cmpi eq, %arg1, %c2_i32 : i32
    %17 = arith.extui %16 : i1 to i32
    %c0_i32_8 = arith.constant 0 : i32
    %18 = arith.cmpi ne, %17, %c0_i32_8 : i32
    scf.if %18 {
      %c0_9 = arith.constant 0 : index
      %c0_10 = arith.constant 0 : index
      %19 = vector.load %arg8[%c0_9, %c0_10] : memref<128x128xf32, #tpu.memory_space<vmem>>, vector<128x128xf32>
      %c0_11 = arith.constant 0 : index
      %c0_12 = arith.constant 0 : index
      %20 = vector.load %arg4[%c0_11, %c0_12] : memref<128x1xf32, #tpu.memory_space<vmem>>, vector<128x1xf32>
      %21 = vector.broadcast %20 : vector<128x1xf32> to vector<128x128xf32>
      %22 = arith.mulf %19, %21 : vector<128x128xf32>
      %23 = arith.truncf %22 : vector<128x128xf32> to vector<128x128xbf16>
      %c0_13 = arith.constant 0 : index
      %c0_14 = arith.constant 0 : index
      %24 = vector.load %arg5[%c0_13, %c0_14] : memref<128x128xbf16, #tpu.memory_space<vmem>>, vector<128x128xbf16>
      %cst_15 = arith.constant dense<0.000000e+00> : vector<128x128xf32>
      %25 = tpu.matmul %23, %24, %cst_15 {dimension_numbers = #tpu.dot_dimension_numbers<[1], [0], [0], [1], [0, 0, 1, 1], [], []>} : vector<128x128xbf16>, vector<128x128xbf16>, vector<128x128xf32> -> vector<128x128xf32>
      %c0_16 = arith.constant 0 : index
      %c0_17 = arith.constant 0 : index
      %26 = vector.load %arg6[%c0_16, %c0_17] : memref<1x128xf32, #tpu.memory_space<vmem>>, vector<1x128xf32>
      %27 = vector.broadcast %26 : vector<1x128xf32> to vector<128x128xf32>
      %28 = arith.addf %25, %27 : vector<128x128xf32>
      %c0_18 = arith.constant 0 : index
      %c0_19 = arith.constant 0 : index
      %29 = vector.load %arg7[%c0_18, %c0_19] : memref<128x128xf32, #tpu.memory_space<vmem>>, vector<128x128xf32>
      tpu.vector_store %arg7[%c0_18, %c0_19], %28 {strides = array<i32>} : memref<128x128xf32, #tpu.memory_space<vmem>>, vector<128x128xf32>,
    } else {
    }
    return
  }
  func.func @transform_0(%arg0: i32, %arg1: i32) -> (i32, i32) {
    %c0_i32 = arith.constant 0 : i32
    return %arg0, %arg1 : i32, i32
  }
  func.func @transform_1(%arg0: i32, %arg1: i32) -> (i32, i32) {
    %c0_i32 = arith.constant 0 : i32
    %c0_i32_0 = arith.constant 0 : i32
    %c0_i32_1 = arith.constant 0 : i32
    return %c0_i32, %c0_i32_0 : i32, i32
  }
  func.func @transform_2(%arg0: i32, %arg1: i32) -> (i32, i32) {
    %c0_i32 = arith.constant 0 : i32
    %c0_i32_0 = arith.constant 0 : i32
    return %arg0, %c0_i32 : i32, i32
  }
  func.func @transform_3(%arg0: i32, %arg1: i32) -> (i32, i32) {
    %c0_i32 = arith.constant 0 : i32
    %c0_i32_0 = arith.constant 0 : i32
    %c0_i32_1 = arith.constant 0 : i32
    return %c0_i32, %c0_i32_0 : i32, i32
  }
  func.func @transform_4(%arg0: i32, %arg1: i32) -> (i32, i32) {
    %c0_i32 = arith.constant 0 : i32
    %c0_i32_0 = arith.constant 0 : i32
    %c0_i32_1 = arith.constant 0 : i32
    return %c0_i32, %c0_i32_0 : i32, i32
  }
  func.func @transform_5(%arg0: i32, %arg1: i32) -> (i32, i32) {
    %c0_i32 = arith.constant 0 : i32
    %c0_i32_0 = arith.constant 0 : i32
    return %arg0, %c0_i32 : i32, i32
  }
}

</mosaic_0001>

<llo_original>
// kernel: tpu_custom_call.1
$region0: #{tpu_custom_call.1}
  #allocation0 [shape = 'u32[]', space=smem, size = 0x4, offset = 0x4, fixed_abs, tag = 'smem constant byte address 0x4 - core index']
  #allocation1 [shape = 'u32[144,128]{1,0:T(1,128)}', space=vmem, size = 0x12000, scoped, tag = 'internal scratch']
  #allocation2 [shape = 'f32[128,128]{1,0:T(8,128)}', space=vmem, size = 0x10000, scoped, tag = 'scratch operand']
  %s0 = inlined_call_operand.vmem [shape: s8[384,384], index: 0, kind: input, shape index: {}]
  %s1 = inlined_call_operand.hbm [shape: bf16[384,128], index: 1, kind: input, shape index: {}]
  %s2 = inlined_call_operand.vmem [shape: f32[384,1], index: 2, kind: input, shape index: {}]
  %s3 = inlined_call_operand.vmem [shape: bf16[128,128], index: 3, kind: input, shape index: {}]
  %s4 = inlined_call_operand.vmem [shape: f32[1,128], index: 4, kind: input, shape index: {}]
  %s5 = inlined_call_operand.hbm [shape: f32[384,128], index: 5, kind: output, shape index: {}]
  %s6 = sld [smem:[#allocation0]]
  $region107: #{tpu_custom_call.1} parent=0
    _
  %s8 = ssub.s32 1, %s6
  %s9 = scalar_select 0, %s8, %s6
  $region1: #{tpu_custom_call.1} parent=0
    #allocation3 [shape = 'u8[32768]{0}', space=vmem, size = 0x8000, scoped, tag = 'input window, operand 0']
    #allocation4 [shape = 'u8[98304]{0}', space=vmem, size = 0x18000, scoped, tag = 'input window, operand 1, single buffered']
    #allocation5 [shape = 's32[2]{0}', space=sflag, size = 0x8, scoped, tag = 'scoped memory for tpu_custom_call.1']
    #allocation6 [shape = 's32[2]{0}', space=sflag, size = 0x8, scoped, tag = 'scoped memory for tpu_custom_call.1']
    #allocation7 [shape = 'u8[131072]{0}', space=vmem, size = 0x20000, scoped, tag = 'output window, operand 0']
    %10 = vsyncpa [#allocation5], 0
    %11 = vsyncpa [#allocation6], 0
    %s12 = scalar_lea.sflag [#allocation6], 1
    %13 = vsyncpa %s12, 0
    loop: start=0, step=1, limit=11
    $region2: #{tpu_custom_call.1} parent=1 // loop_pre_header
      _
    $region3: #{tpu_custom_call.1} parent=1 // loop_header
      %s15 = sphi 0, %s19
      %p16 = scmp.ge.s32.totalorder %s15, 11
      %s22 = sphi 0, %s34
      %s23 = sphi 0, %s30
      %s24 = sphi 0, %s22
      %s25 = sphi 0, %s23
      %s26 = sphi 0, %s24
      %s27 = sphi 0, %s25
      %s39 = sphi 0, %s41
      %s42 = sphi 0, %s39
      %s43 = sphi 0, %s42
      %s59 = sphi 0, %s43
      %s63 = sphi 0, %s63
      %s65 = sphi 0, %s63
      %s66 = sphi 0, %s65
      %s80 = sphi 0, %s66
      %s86 = sphi 0, %s88
      %s89 = sphi 0, %s86
      %s90 = sphi 0, %s89
      %s106 = sphi 0, %s90
      %s110 = sphi 0, %s110
      %s112 = sphi 0, %s110
      %s113 = sphi 0, %s112
      %s127 = sphi 0, %s113
      %s131 = sphi 0, %s131
      %s133 = sphi 0, %s131
      %s134 = sphi 0, %s133
      %s148 = sphi 0, %s134
      %s154 = sphi 0, %s156
      %s157 = sphi 0, %s154
      %s158 = sphi 0, %s157
      %s174 = sphi 0, %s158
    $region4: #{tpu_custom_call.1} parent=1 // loop_header_branch
      %18 = sbr.rel (%p16) target = $region8
    $region5: #{tpu_custom_call.1} parent=1 // loop_body
      %s20 = ssub.s32 %s15, 1
      %s21 = ssub.s32 %s15, 2
      %s28 = sadd.s32 1, %s23
      %p29 = scmp.ge.s32.totalorder %s28, 3
      %s30 = scalar_select %p29, 0, %s28
      %s31 = sadd.s32 1, %s22
      %s32 = scalar_select %p29, %s31, %s22
      %p33 = scmp.ge.s32.totalorder %s32, 3
      %s34 = scalar_select %p33, 0, %s32
      %s35 = ssub.s32 %s22, %s34
      %s36 = ssub.s32 %s23, %s30
      %s37 = sor.u32 %s35, %s36
      %p38 = scmp.eq.s32.totalorder %s37, 0
      %s40 = sadd.s32 %s39, 1
      %s41 = scalar_select %p38, %s39, %s40
      %p44 = pneg %p38
      %p45 = scmp.eq.s32.totalorder %s15, 8
      %p46 = por %p44, %p45
      %p47 = scmp.ne.s32.totalorder %s39, %s42
      %p48 = scmp.eq.s32.totalorder %s15, 0
      %p49 = por %p47, %p48
      %p50 = scmp.ne.s32.totalorder %s39, %s42
      %p51 = scmp.eq.s32.totalorder %s20, 8
      %p52 = por %p50, %p51
      %p53 = scmp.ne.s32.totalorder %s42, %s43
      %p54 = scmp.eq.s32.totalorder %s20, 0
      %p55 = por %p53, %p54
      %p56 = scmp.ne.s32.totalorder %s42, %s43
      %p57 = scmp.eq.s32.totalorder %s21, 8
      %p58 = por %p56, %p57
      %p60 = scmp.ne.s32.totalorder %s43, %s59
      %p61 = scmp.eq.s32.totalorder %s21, 0
      %p62 = por %p60, %p61
      %s64 = sadd.s32 %s63, 1
      %p67 = scmp.eq.s32.totalorder %s15, 8
      %p68 = scmp.ne.s32.totalorder %s63, %s65
      %p69 = scmp.eq.s32.totalorder %s15, 0
      %p70 = por %p68, %p69
      %p71 = scmp.ne.s32.totalorder %s63, %s65
      %p72 = scmp.eq.s32.totalorder %s20, 8
      %p73 = por %p71, %p72
      %p74 = scmp.ne.s32.totalorder %s65, %s66
      %p75 = scmp.eq.s32.totalorder %s20, 0
      %p76 = por %p74, %p75
      %p77 = scmp.ne.s32.totalorder %s65, %s66
      %p78 = scmp.eq.s32.totalorder %s21, 8
      %p79 = por %p77, %p78
      %p81 = scmp.ne.s32.totalorder %s66, %s80
      %p82 = scmp.eq.s32.totalorder %s21, 0
      %p83 = por %p81, %p82
      %s84 = ssub.s32 %s22, %s34
      %p85 = scmp.eq.s32.totalorder %s84, 0
      %s87 = sadd.s32 %s86, 1
      %s88 = scalar_select %p85, %s86, %s87
      %p91 = pneg %p85
      %p92 = scmp.eq.s32.totalorder %s15, 8
      %p93 = por %p91, %p92
      %p94 = scmp.ne.s32.totalorder %s86, %s89
      %p95 = scmp.eq.s32.totalorder %s15, 0
      %p96 = por %p94, %p95
      %p97 = scmp.ne.s32.totalorder %s86, %s89
      %p98 = scmp.eq.s32.totalorder %s20, 8
      %p99 = por %p97, %p98
      %p100 = scmp.ne.s32.totalorder %s89, %s90
      %p101 = scmp.eq.s32.totalorder %s20, 0
      %p102 = por %p100, %p101
      %p103 = scmp.ne.s32.totalorder %s89, %s90
      %p104 = scmp.eq.s32.totalorder %s21, 8
      %p105 = por %p103, %p104
      %p107 = scmp.ne.s32.totalorder %s90, %s106
      %p108 = scmp.eq.s32.totalorder %s21, 0
      %p109 = por %p107, %p108
      %s111 = sadd.s32 %s110, 1
      %p114 = scmp.eq.s32.totalorder %s15, 8
      %p115 = scmp.ne.s32.totalorder %s110, %s112
      %p116 = scmp.eq.s32.totalorder %s15, 0
      %p117 = por %p115, %p116
      %p118 = scmp.ne.s32.totalorder %s110, %s112
      %p119 = scmp.eq.s32.totalorder %s20, 8
      %p120 = por %p118, %p119
      %p121 = scmp.ne.s32.totalorder %s112, %s113
      %p122 = scmp.eq.s32.totalorder %s20, 0
      %p123 = por %p121, %p122
      %p124 = scmp.ne.s32.totalorder %s112, %s113
      %p125 = scmp.eq.s32.totalorder %s21, 8
      %p126 = por %p124, %p125
      %p128 = scmp.ne.s32.totalorder %s113, %s127
      %p129 = scmp.eq.s32.totalorder %s21, 0
      %p130 = por %p128, %p129
      %s132 = sadd.s32 %s131, 1
      %p135 = scmp.eq.s32.totalorder %s15, 8
      %p136 = scmp.ne.s32.totalorder %s131, %s133
      %p137 = scmp.eq.s32.totalorder %s15, 0
      %p138 = por %p136, %p137
      %p139 = scmp.ne.s32.totalorder %s131, %s133
      %p140 = scmp.eq.s32.totalorder %s20, 8
      %p141 = por %p139, %p140
      %p142 = scmp.ne.s32.totalorder %s133, %s134
      %p143 = scmp.eq.s32.totalorder %s20, 0
      %p144 = por %p142, %p143
      %p145 = scmp.ne.s32.totalorder %s133, %s134
      %p146 = scmp.eq.s32.totalorder %s21, 8
      %p147 = por %p145, %p146
      %p149 = scmp.ne.s32.totalorder %s134, %s148
      %p150 = scmp.eq.s32.totalorder %s21, 0
      %p151 = por %p149, %p150
      %s152 = ssub.s32 %s22, %s34
      %p153 = scmp.eq.s32.totalorder %s152, 0
      %s155 = sadd.s32 %s154, 1
      %s156 = scalar_select %p153, %s154, %s155
      %p159 = pneg %p153
      %p160 = scmp.eq.s32.totalorder %s15, 8
      %p161 = por %p159, %p160
      %p162 = scmp.ne.s32.totalorder %s154, %s157
      %p163 = scmp.eq.s32.totalorder %s15, 0
      %p164 = por %p162, %p163
      %p165 = scmp.ne.s32.totalorder %s154, %s157
      %p166 = scmp.eq.s32.totalorder %s20, 8
      %p167 = por %p165, %p166
      %p168 = scmp.ne.s32.totalorder %s157, %s158
      %p169 = scmp.eq.s32.totalorder %s20, 0
      %p170 = por %p168, %p169
      %p171 = scmp.ne.s32.totalorder %s157, %s158
      %p172 = scmp.eq.s32.totalorder %s21, 8
      %p173 = por %p171, %p172
      %p175 = scmp.ne.s32.totalorder %s158, %s174
      %p176 = scmp.eq.s32.totalorder %s21, 0
      %p177 = por %p175, %p176
      %p178 = scmp.le.s32.totalorder 1, %s15
      %p179 = scmp.lt.s32.totalorder %s15, 10
      %p180 = pnand %p178, %p179
      %p181 = pneg %p180
      // Predicated region
      $region9: #{tpu_custom_call.1} parent=5 // pred_check
        _
      $region10: #{tpu_custom_call.1} parent=5 // pred_check_branch
        %183 = sbr.rel (%p180) target = $region12
      $region11: #{tpu_custom_call.1} parent=5 // pred_region
        %s184 = ssub.s32 %s15, 1
        // Predicated region
        $region13: #{tpu_custom_call.1} parent=11 // pred_check
          %p185 = pneg %p76
        $region14: #{tpu_custom_call.1} parent=11 // pred_check_branch
          %187 = sbr.rel (%p185) target = $region16
        $region15: #{tpu_custom_call.1} parent=11 // pred_region
          %s189 = ssub.s32 3072, 3072
          %190 = vsyncadd [#allocation5], %s189
          %s191 = sshll.u32 [#allocation4], 4
          %s192 = int_to_ptr.vmem [resolvable:$true] %s191
          %197 = dma.hbm_to_vmem [thread:$0]  %s1, 3072, %s192, [#allocation5], 64, 64, 4
        $region16: #{tpu_custom_call.1} parent=11 // pred_fallthru
          _
        // Predicated region
        $region17: #{tpu_custom_call.1} parent=11 // pred_check
          %p198 = pneg %p123
        $region18: #{tpu_custom_call.1} parent=11 // pred_check_branch
          %200 = sbr.rel (%p198) target = $region20
        $region19: #{tpu_custom_call.1} parent=11 // pred_region
          _
        $region20: #{tpu_custom_call.1} parent=11 // pred_fallthru
          _
        // Predicated region
        $region21: #{tpu_custom_call.1} parent=11 // pred_check
          %p201 = pneg %p144
        $region22: #{tpu_custom_call.1} parent=11 // pred_check_branch
          %203 = sbr.rel (%p201) target = $region24
        $region23: #{tpu_custom_call.1} parent=11 // pred_region
          _
        $region24: #{tpu_custom_call.1} parent=11 // pred_fallthru
          _
      $region12: #{tpu_custom_call.1} parent=5 // pred_fallthru
        _
      %p204 = scmp.lt.s32.totalorder %s15, 9
      // Predicated region
      $region25: #{tpu_custom_call.1} parent=5 // pred_check
        %p205 = pneg %p204
      $region26: #{tpu_custom_call.1} parent=5 // pred_check_branch
        %207 = sbr.rel (%p205) target = $region28
      $region27: #{tpu_custom_call.1} parent=5 // pred_region
        // Predicated region
        $region29: #{tpu_custom_call.1} parent=27 // pred_check
          %p208 = pneg %p49
        $region30: #{tpu_custom_call.1} parent=27 // pred_check_branch
          %210 = sbr.rel (%p208) target = $region32
        $region31: #{tpu_custom_call.1} parent=27 // pred_region
          %s211 = sand.u32 %s39, 1
          %s212 = sand.u32 %s39, 1
          %s213 = smul.addr %s212, 32
          %s214 = scalar_lea.vmem [#allocation3], %s213
          %s215 = smul.u32 4, %s22
          %s216 = smul.addr %s215, 3
          %s217 = sadd.s32 %s23, %s216
          %s218 = smul.addr %s217, 8
          %s219 = scalar_lea.vmem %s0, %s218
          // Predicated region
          $region33: #{tpu_custom_call.1} parent=31 // pred_check
            _
          $region34: #{tpu_custom_call.1} parent=31 // pred_check_branch
            %221 = sbr.rel (0) target = $region36
          $region35: #{tpu_custom_call.1} parent=31 // pred_region
            // Predicated region
            $region37: #{tpu_custom_call.1} parent=35 // pred_check
              _
            $region38: #{tpu_custom_call.1} parent=35 // pred_check_branch
              %223 = sbr.rel (0) target = $region40
            $region39: #{tpu_custom_call.1} parent=35 // pred_region
              // Predicated region
              $region52: #{tpu_custom_call.1} parent=39 // pred_check
                _
              $region53: #{tpu_custom_call.1} parent=39 // pred_check_branch
                %245 = sbr.rel (0) target = $region55
              $region54: #{tpu_custom_call.1} parent=39 // pred_region
                loop: start=0, step=1, limit=1
                $region56: #{tpu_custom_call.1} parent=54 // loop_pre_header
                  _
                $region57: #{tpu_custom_call.1} parent=54 // loop_header
                  %s247 = sphi 0, %s251
                  %p248 = scmp.ge.s32.totalorder %s247, 1
                  %s252 = sphi %s219, %s219
                  %s253 = sphi %s214, %s214
                $region58: #{tpu_custom_call.1} parent=54 // loop_header_branch
                  %250 = sbr.rel (%p248) target = $region62
                $region59: #{tpu_custom_call.1} parent=54 // loop_body
                  %v254 = vld [vmem:[%s252] sm:$0xff]
                  %255 = vst [vmem:[%s253] sm:$0xff] %v254
                  %v256 = vld [vmem:[%s252 + $0x18] sm:$0xff]
                  %257 = vst [vmem:[%s253 + $0x8] sm:$0xff] %v256
                  %v258 = vld [vmem:[%s252 + $0x30] sm:$0xff]
                  %259 = vst [vmem:[%s253 + $0x10] sm:$0xff] %v258
                  %v260 = vld [vmem:[%s252 + $0x48] sm:$0xff]
                  %261 = vst [vmem:[%s253 + $0x18] sm:$0xff] %v260
                $region60: #{tpu_custom_call.1} parent=54 // loop_footer
                  %s251 = sadd.s32 1, %s247
                $region61: #{tpu_custom_call.1} parent=54 // loop_footer_branch
                  %246 = sbr.rel target = $region57
                $region62: #{tpu_custom_call.1} parent=54 // loop_exit
                  _
              $region55: #{tpu_custom_call.1} parent=39 // pred_fallthru
                _
              // Predicated region
              $region63: #{tpu_custom_call.1} parent=39 // pred_check
                _
              $region64: #{tpu_custom_call.1} parent=39 // pred_check_branch
                %263 = sbr.rel target = $region66
              $region65: #{tpu_custom_call.1} parent=39 // pred_region
                _
              $region66: #{tpu_custom_call.1} parent=39 // pred_fallthru
                _
            $region40: #{tpu_custom_call.1} parent=35 // pred_fallthru
              _
            // Predicated region
            $region41: #{tpu_custom_call.1} parent=35 // pred_check
              _
            $region42: #{tpu_custom_call.1} parent=35 // pred_check_branch
              %225 = sbr.rel target = $region44
            $region43: #{tpu_custom_call.1} parent=35 // pred_region
              %s227 = ssub.s32 256, 1
              loop: start=0, step=1, limit=1
              $region45: #{tpu_custom_call.1} parent=43 // loop_pre_header
                _
              $region46: #{tpu_custom_call.1} parent=43 // loop_header
                %s229 = sphi 0, %s233
                %p230 = scmp.ge.s32.totalorder %s229, 1
                %s234 = sphi %s219, %s219
                %s235 = sphi %s214, %s214
              $region47: #{tpu_custom_call.1} parent=43 // loop_header_branch
                %232 = sbr.rel (%p230) target = $region51
              $region48: #{tpu_custom_call.1} parent=43 // loop_body
                %v236 = vld [vmem:[%s234] sm:%s227]
                %237 = vst [vmem:[%s235] sm:%s227] %v236
                %v238 = vld [vmem:[%s234 + $0x18] sm:%s227]
                %239 = vst [vmem:[%s235 + $0x8] sm:%s227] %v238
                %v240 = vld [vmem:[%s234 + $0x30] sm:%s227]
                %241 = vst [vmem:[%s235 + $0x10] sm:%s227] %v240
                %v242 = vld [vmem:[%s234 + $0x48] sm:%s227]
                %243 = vst [vmem:[%s235 + $0x18] sm:%s227] %v242
              $region49: #{tpu_custom_call.1} parent=43 // loop_footer
                %s233 = sadd.s32 1, %s229
              $region50: #{tpu_custom_call.1} parent=43 // loop_footer_branch
                %228 = sbr.rel target = $region46
              $region51: #{tpu_custom_call.1} parent=43 // loop_exit
                _
            $region44: #{tpu_custom_call.1} parent=35 // pred_fallthru
              _
          $region36: #{tpu_custom_call.1} parent=31 // pred_fallthru
            _
          %264 = vnop
        $region32: #{tpu_custom_call.1} parent=27 // pred_fallthru
          _
        // Predicated region
        $region67: #{tpu_custom_call.1} parent=27 // pred_check
          %p265 = pneg %p96
        $region68: #{tpu_custom_call.1} parent=27 // pred_check_branch
          %267 = sbr.rel (%p265) target = $region70
        $region69: #{tpu_custom_call.1} parent=27 // pred_region
          %s268 = smul.u32 16, %s22
          %p269 = scmp.lt.s32.totalorder %s268, 47
          %s270 = scalar_select %p269, %s268, 47
          %s271 = smul.addr %s270, 8
          %s272 = scalar_lea.vmem %s2, %s271
          %s273 = smul.u32 16, %s22
        $region70: #{tpu_custom_call.1} parent=27 // pred_fallthru
          _
      $region28: #{tpu_custom_call.1} parent=5 // pred_fallthru
        _
      %p274 = scmp.le.s32.totalorder 1, %s15
      %p275 = scmp.lt.s32.totalorder %s15, 10
      %p276 = pnand %p274, %p275
      %p277 = pneg %p276
      // Predicated region
      $region71: #{tpu_custom_call.1} parent=5 // pred_check
        _
      $region72: #{tpu_custom_call.1} parent=5 // pred_check_branch
        %279 = sbr.rel (%p276) target = $region74
      $region73: #{tpu_custom_call.1} parent=5 // pred_region
        %s280 = ssub.s32 %s15, 1
        %s281 = sand.u32 %s42, 1
        %s282 = sand.u32 %s42, 1
        %s283 = smul.addr %s282, 32
        %s284 = scalar_lea.vmem [#allocation3], %s283
        // Predicated region
        $region75: #{tpu_custom_call.1} parent=73 // pred_check
          %p285 = pneg %p55
        $region76: #{tpu_custom_call.1} parent=73 // pred_check_branch
          %287 = sbr.rel (%p285) target = $region78
        $region77: #{tpu_custom_call.1} parent=73 // pred_region
          _
        $region78: #{tpu_custom_call.1} parent=73 // pred_fallthru
          _
        // Predicated region
        $region79: #{tpu_custom_call.1} parent=73 // pred_check
          %p288 = pneg %p76
        $region80: #{tpu_custom_call.1} parent=73 // pred_check_branch
          %290 = sbr.rel (%p288) target = $region82
        $region81: #{tpu_custom_call.1} parent=73 // pred_region
          %291 = dma.done [#allocation5], 3072
        $region82: #{tpu_custom_call.1} parent=73 // pred_fallthru
          _
        %s292 = sand.u32 %s42, 1
        %s293 = sand.u32 %s42, 1
        %s294 = smul.addr %s293, 32
        %s295 = scalar_lea.vmem [#allocation3], %s294
        %p296 = pneg %p55
        %p297 = pneg %p52
        %p298 = pneg %p76
        %p299 = pneg %p73
        %s300 = smul.u32 16, %s24
        %p301 = scmp.lt.s32.totalorder %s300, 47
        %s302 = scalar_select %p301, %s300, 47
        %s303 = smul.addr %s302, 8
        %s304 = scalar_lea.vmem %s2, %s303
        %p305 = pneg %p102
        %p306 = pneg %p99
        %p307 = pneg %p123
        %p308 = pneg %p120
        %p309 = pneg %p144
        %p310 = pneg %p141
        %p311 = pneg %p170
        %p312 = pneg %p167
        %s313 = sand.u32 %s157, 1
        %s314 = scalar_lea.sflag [#allocation6], %s313
        %s315 = sand.u32 %s157, 1
        %s316 = smul.addr %s315, 128
        %s317 = scalar_lea.vmem [#allocation7], %s316
        %s318 = smul.u32 4, %s24
        %s319 = smul.u32 16, %s24
        %p320 = scmp.lt.s32.totalorder %s319, 47
        %s321 = scalar_select %p320, %s319, 47
        %s322 = smul.addr %s321, 8
        %s323 = scalar_lea.vmem %s2, %s322
        %s324 = smul.u32 16, %s24
        %s325 = smul.u32 16, %s24
        %p327 = scmp.eq.s32.totalorder %s25, 0
        // Predicated region
        $region83: #{tpu_custom_call.1} parent=73 // pred_check
          %p328 = pneg %p327
        $region84: #{tpu_custom_call.1} parent=73 // pred_check_branch
          %330 = sbr.rel (%p328) target = $region86
        $region85: #{tpu_custom_call.1} parent=73 // pred_region
          %331 = vst [vmem:[#allocation2] sm:$0xff] 0.0
          %332 = vst [vmem:[#allocation2 + $0x8] sm:$0xff] 0.0
          %333 = vst [vmem:[#allocation2 + $0x10] sm:$0xff] 0.0
          %334 = vst [vmem:[#allocation2 + $0x18] sm:$0xff] 0.0
          %335 = vst [vmem:[#allocation2 + $0x20] sm:$0xff] 0.0
          %336 = vst [vmem:[#allocation2 + $0x28] sm:$0xff] 0.0
          %337 = vst [vmem:[#allocation2 + $0x30] sm:$0xff] 0.0
          %338 = vst [vmem:[#allocation2 + $0x38] sm:$0xff] 0.0
          %339 = vst [vmem:[#allocation2 + $0x40] sm:$0xff] 0.0
          %340 = vst [vmem:[#allocation2 + $0x48] sm:$0xff] 0.0
          %341 = vst [vmem:[#allocation2 + $0x50] sm:$0xff] 0.0
          %342 = vst [vmem:[#allocation2 + $0x58] sm:$0xff] 0.0
          %343 = vst [vmem:[#allocation2 + $0x60] sm:$0xff] 0.0
          %344 = vst [vmem:[#allocation2 + $0x68] sm:$0xff] 0.0
          %345 = vst [vmem:[#allocation2 + $0x70] sm:$0xff] 0.0
          %346 = vst [vmem:[#allocation2 + $0x78] sm:$0xff] 0.0
        $region86: #{tpu_custom_call.1} parent=73 // pred_fallthru
          _
        %s347 = smul.u32 %s25, 128
        %s348 = sshra.s32 %s347, 3
        %s349 = sand.u32 %s347, 7
        %s350 = smul.addr %s348, 4
        %s351 = scalar_lea.vmem [#allocation4], %s350
        %v352 = vld [vmem:[%s351] sm:$0xf]
        %v353 = vld [vmem:[%s351 + $0x4] sm:$0xf]
        %v354 = vld [vmem:[%s351 + $0x8] sm:$0xf]
        %v355 = vld [vmem:[%s351 + $0xc] sm:$0xf]
        %v356 = vld [vmem:[%s351 + $0x10] sm:$0xf]
        %v357 = vld [vmem:[%s351 + $0x14] sm:$0xf]
        %v358 = vld [vmem:[%s351 + $0x18] sm:$0xf]
        %v359 = vld [vmem:[%s351 + $0x1c] sm:$0xf]
        %v360 = vld [vmem:[%s351 + $0x20] sm:$0xf]
        %v361 = vld [vmem:[%s351 + $0x24] sm:$0xf]
        %v362 = vld [vmem:[%s351 + $0x28] sm:$0xf]
        %v363 = vld [vmem:[%s351 + $0x2c] sm:$0xf]
        %v364 = vld [vmem:[%s351 + $0x30] sm:$0xf]
        %v365 = vld [vmem:[%s351 + $0x34] sm:$0xf]
        %v366 = vld [vmem:[%s351 + $0x38] sm:$0xf]
        %v367 = vld [vmem:[%s351 + $0x3c] sm:$0xf]
        %v368 = vld [vmem:[%s284] sm:$0xff]
        %v369 = vld [vmem:[%s284 + $0x8] sm:$0xff]
        %v370 = vld [vmem:[%s284 + $0x10] sm:$0xff]
        %v371 = vld [vmem:[%s284 + $0x18] sm:$0xff]
        %v372 = vunpack.c.l.s8.bf16 %v368
        %v373 = vunpack.c.h.s8.bf16 %v368
        %v374 = vunpack.c.l.s8.bf16 %v369
        %v375 = vunpack.c.h.s8.bf16 %v369
        %v376 = vunpack.c.l.s8.bf16 %v370
        %v377 = vunpack.c.h.s8.bf16 %v370
        %v378 = vunpack.c.l.s8.bf16 %v371
        %v379 = vunpack.c.h.s8.bf16 %v371
        %v380 = vld [vmem:[#allocation2] sm:$0xff]
        %v381 = vld [vmem:[#allocation2 + $0x8] sm:$0xff]
        %v382 = vld [vmem:[#allocation2 + $0x10] sm:$0xff]
        %v383 = vld [vmem:[#allocation2 + $0x18] sm:$0xff]
        %v384 = vld [vmem:[#allocation2 + $0x20] sm:$0xff]
        %v385 = vld [vmem:[#allocation2 + $0x28] sm:$0xff]
        %v386 = vld [vmem:[#allocation2 + $0x30] sm:$0xff]
        %v387 = vld [vmem:[#allocation2 + $0x38] sm:$0xff]
        %v388 = vld [vmem:[#allocation2 + $0x40] sm:$0xff]
        %v389 = vld [vmem:[#allocation2 + $0x48] sm:$0xff]
        %v390 = vld [vmem:[#allocation2 + $0x50] sm:$0xff]
        %v391 = vld [vmem:[#allocation2 + $0x58] sm:$0xff]
        %v392 = vld [vmem:[#allocation2 + $0x60] sm:$0xff]
        %v393 = vld [vmem:[#allocation2 + $0x68] sm:$0xff]
        %v394 = vld [vmem:[#allocation2 + $0x70] sm:$0xff]
        %v395 = vld [vmem:[#allocation2 + $0x78] sm:$0xff]
        %v412 = vunpack.c.l.b16 %v352
        %v413 = vunpack.c.l.b16 %v353
        %v414 = vunpack.c.l.b16 %v354
        %v415 = vunpack.c.l.b16 %v355
        %v416 = vunpack.c.l.b16 %v356
        %v417 = vunpack.c.l.b16 %v357
        %v418 = vunpack.c.l.b16 %v358
        %v419 = vunpack.c.l.b16 %v359
        %v420 = vunpack.c.l.b16 %v360
        %v421 = vunpack.c.l.b16 %v361
        %v422 = vunpack.c.l.b16 %v362
        %v423 = vunpack.c.l.b16 %v363
        %v424 = vunpack.c.l.b16 %v364
        %v425 = vunpack.c.l.b16 %v365
        %v426 = vunpack.c.l.b16 %v366
        %v427 = vunpack.c.l.b16 %v367
        %v428 = vpack.c.b16 %v413, %v412
        %v429 = vpack.c.b16 %v415, %v414
        %v430 = vpack.c.b16 %v417, %v416
        %v431 = vpack.c.b16 %v419, %v418
        %v432 = vpack.c.b16 %v421, %v420
        %v433 = vpack.c.b16 %v423, %v422
        %v434 = vpack.c.b16 %v425, %v424
        %v435 = vpack.c.b16 %v427, %v426
        %444 = vmatprep.subr.bf16.mxu0 0
        %445 = vmatpush1.bf16.msra.mxu0 %v435
        %446 = vmatprep.subr.bf16.mxu0 0
        %447 = vmatpush1.bf16.msra.mxu0 %v434
        %448 = vmatprep.subr.bf16.mxu0 0
        %449 = vmatpush1.bf16.msra.mxu0 %v433
        %450 = vmatprep.subr.bf16.mxu0 0
        %451 = vmatpush1.bf16.msra.mxu0 %v432
        %452 = vmatprep.subr.bf16.mxu0 0
        %453 = vmatpush1.bf16.msra.mxu0 %v431
        %454 = vmatprep.subr.bf16.mxu0 0
        %455 = vmatpush1.bf16.msra.mxu0 %v430
        %456 = vmatprep.subr.bf16.mxu0 0
        %457 = vmatpush1.bf16.msra.mxu0 %v429
        %458 = vmatprep.subr.bf16.mxu0 0
        %459 = vmatpush1.bf16.msra.mxu0 %v428
        %460 = vmatprep.subr.bf16.mxu0 0
        %461 = vmatpush2.bf16.msra.mxu0 0
        %462 = vmatprep.subr.bf16.mxu0 0
        %463 = vmatpush2.bf16.msra.mxu0 0
        %464 = vmatprep.subr.bf16.mxu0 0
        %465 = vmatpush2.bf16.msra.mxu0 0
        %466 = vmatprep.subr.bf16.mxu0 0
        %467 = vmatpush2.bf16.msra.mxu0 0
        %468 = vmatprep.subr.bf16.mxu0 0
        %469 = vmatpush2.bf16.msra.mxu0 0
        %470 = vmatprep.subr.bf16.mxu0 0
        %471 = vmatpush2.bf16.msra.mxu0 0
        %472 = vmatprep.subr.bf16.mxu0 0
        %473 = vmatpush2.bf16.msra.mxu0 0
        %474 = vmatprep.subr.bf16.mxu0 0
        %475 = vmatpush2.bf16.msra.mxu0 0
        %476 = vmatprep.mubr.bf16.mxu0 0
        %477 = vmatmul.mubr.bf16.gmra.mxu0 %v372
        %v478 = vpop.f32.mrf.mxu0
        %v479 = vadd.f32 0.0, %v478
        %v480 = vpop.f32.mrf.mxu0
        %v481 = vpop.f32.mrf.mxu0
        %v482 = vadd.f32 0.0, %v481
        %v483 = vpop.f32.mrf.mxu0
        %484 = vmatprep.mubr.bf16.mxu0 0
        %485 = vmatmul.mubr.bf16.gmra.mxu0 %v373
        %v486 = vpop.f32.mrf.mxu0
        %v487 = vadd.f32 0.0, %v486
        %v488 = vpop.f32.mrf.mxu0
        %v489 = vpop.f32.mrf.mxu0
        %v490 = vadd.f32 0.0, %v489
        %v491 = vpop.f32.mrf.mxu0
        %492 = vmatprep.mubr.bf16.mxu0 0
        %493 = vmatmul.mubr.bf16.gmra.mxu0 %v374
        %v494 = vpop.f32.mrf.mxu0
        %v495 = vadd.f32 0.0, %v494
        %v496 = vpop.f32.mrf.mxu0
        %v497 = vpop.f32.mrf.mxu0
        %v498 = vadd.f32 0.0, %v497
        %v499 = vpop.f32.mrf.mxu0
        %500 = vmatprep.mubr.bf16.mxu0 0
        %501 = vmatmul.mubr.bf16.gmra.mxu0 %v375
        %v502 = vpop.f32.mrf.mxu0
        %v503 = vadd.f32 0.0, %v502
        %v504 = vpop.f32.mrf.mxu0
        %v505 = vpop.f32.mrf.mxu0
        %v506 = vadd.f32 0.0, %v505
        %v507 = vpop.f32.mrf.mxu0
        %508 = vmatprep.mubr.bf16.mxu0 0
        %509 = vmatmul.mubr.bf16.gmra.mxu0 %v376
        %v510 = vpop.f32.mrf.mxu0
        %v511 = vadd.f32 0.0, %v510
        %v512 = vpop.f32.mrf.mxu0
        %v513 = vpop.f32.mrf.mxu0
        %v514 = vadd.f32 0.0, %v513
        %v515 = vpop.f32.mrf.mxu0
        %516 = vmatprep.mubr.bf16.mxu0 0
        %517 = vmatmul.mubr.bf16.gmra.mxu0 %v377
        %v518 = vpop.f32.mrf.mxu0
        %v519 = vadd.f32 0.0, %v518
        %v520 = vpop.f32.mrf.mxu0
        %v521 = vpop.f32.mrf.mxu0
        %v522 = vadd.f32 0.0, %v521
        %v523 = vpop.f32.mrf.mxu0
        %524 = vmatprep.mubr.bf16.mxu0 0
        %525 = vmatmul.mubr.bf16.gmra.mxu0 %v378
        %v526 = vpop.f32.mrf.mxu0
        %v527 = vadd.f32 0.0, %v526
        %v528 = vpop.f32.mrf.mxu0
        %v529 = vpop.f32.mrf.mxu0
        %v530 = vadd.f32 0.0, %v529
        %v531 = vpop.f32.mrf.mxu0
        %532 = vmatprep.mubr.bf16.mxu0 0
        %533 = vmatmul.mubr.bf16.gmra.mxu0 %v379
        %v534 = vpop.f32.mrf.mxu0
        %v535 = vadd.f32 0.0, %v534
        %v536 = vpop.f32.mrf.mxu0
        %v537 = vpop.f32.mrf.mxu0
        %v538 = vadd.f32 0.0, %v537
        %v539 = vpop.f32.mrf.mxu0
        %540 = vdwg.mxu0
        %v541 = vadd.f32 %v380, %v479
        %v542 = vadd.f32 %v381, %v482
        %v543 = vadd.f32 %v382, %v487
        %v544 = vadd.f32 %v383, %v490
        %v545 = vadd.f32 %v384, %v495
        %v546 = vadd.f32 %v385, %v498
        %v547 = vadd.f32 %v386, %v503
        %v548 = vadd.f32 %v387, %v506
        %v549 = vadd.f32 %v388, %v511
        %v550 = vadd.f32 %v389, %v514
        %v551 = vadd.f32 %v390, %v519
        %v552 = vadd.f32 %v391, %v522
        %v553 = vadd.f32 %v392, %v527
        %v554 = vadd.f32 %v393, %v530
        %v555 = vadd.f32 %v394, %v535
        %v556 = vadd.f32 %v395, %v538
        %557 = vst [vmem:[#allocation2] sm:$0xff] %v541
        %558 = vst [vmem:[#allocation2 + $0x8] sm:$0xff] %v542
        %559 = vst [vmem:[#allocation2 + $0x10] sm:$0xff] %v543
        %560 = vst [vmem:[#allocation2 + $0x18] sm:$0xff] %v544
        %561 = vst [vmem:[#allocation2 + $0x20] sm:$0xff] %v545
        %562 = vst [vmem:[#allocation2 + $0x28] sm:$0xff] %v546
        %563 = vst [vmem:[#allocation2 + $0x30] sm:$0xff] %v547
        %564 = vst [vmem:[#allocation2 + $0x38] sm:$0xff] %v548
        %565 = vst [vmem:[#allocation2 + $0x40] sm:$0xff] %v549
        %566 = vst [vmem:[#allocation2 + $0x48] sm:$0xff] %v550
        %567 = vst [vmem:[#allocation2 + $0x50] sm:$0xff] %v551
        %568 = vst [vmem:[#allocation2 + $0x58] sm:$0xff] %v552
        %569 = vst [vmem:[#allocation2 + $0x60] sm:$0xff] %v553
        %570 = vst [vmem:[#allocation2 + $0x68] sm:$0xff] %v554
        %571 = vst [vmem:[#allocation2 + $0x70] sm:$0xff] %v555
        %572 = vst [vmem:[#allocation2 + $0x78] sm:$0xff] %v556
        %p573 = scmp.eq.s32.totalorder %s25, %s24
        // Predicated region
        $region87: #{tpu_custom_call.1} parent=73 // pred_check
          %p574 = pneg %p573
        $region88: #{tpu_custom_call.1} parent=73 // pred_check_branch
          %576 = sbr.rel (%p574) target = $region90
        $region89: #{tpu_custom_call.1} parent=73 // pred_region
          %v577 = vld [vmem:[#allocation2] sm:$0xff]
          %v578 = vld [vmem:[#allocation2 + $0x8] sm:$0xff]
          %v579 = vld [vmem:[#allocation2 + $0x10] sm:$0xff]
          %v580 = vld [vmem:[#allocation2 + $0x18] sm:$0xff]
          %v581 = vld [vmem:[#allocation2 + $0x20] sm:$0xff]
          %v582 = vld [vmem:[#allocation2 + $0x28] sm:$0xff]
          %v583 = vld [vmem:[#allocation2 + $0x30] sm:$0xff]
          %v584 = vld [vmem:[#allocation2 + $0x38] sm:$0xff]
          %v585 = vld [vmem:[#allocation2 + $0x40] sm:$0xff]
          %v586 = vld [vmem:[#allocation2 + $0x48] sm:$0xff]
          %v587 = vld [vmem:[#allocation2 + $0x50] sm:$0xff]
          %v588 = vld [vmem:[#allocation2 + $0x58] sm:$0xff]
          %v589 = vld [vmem:[#allocation2 + $0x60] sm:$0xff]
          %v590 = vld [vmem:[#allocation2 + $0x68] sm:$0xff]
          %v591 = vld [vmem:[#allocation2 + $0x70] sm:$0xff]
          %v592 = vld [vmem:[#allocation2 + $0x78] sm:$0xff]
          %v593 = vunpack.c.l.bf16 %v352
          %v594 = vunpack.c.l.bf16 %v353
          %v595 = vunpack.c.l.bf16 %v354
          %v596 = vunpack.c.l.bf16 %v355
          %v597 = vunpack.c.l.bf16 %v356
          %v598 = vunpack.c.l.bf16 %v357
          %v599 = vunpack.c.l.bf16 %v358
          %v600 = vunpack.c.l.bf16 %v359
          %v601 = vunpack.c.l.bf16 %v360
          %v602 = vunpack.c.l.bf16 %v361
          %v603 = vunpack.c.l.bf16 %v362
          %v604 = vunpack.c.l.bf16 %v363
          %v605 = vunpack.c.l.bf16 %v364
          %v606 = vunpack.c.l.bf16 %v365
          %v607 = vunpack.c.l.bf16 %v366
          %v608 = vunpack.c.l.bf16 %v367
          %v609 = vadd.f32 %v577, %v593
          %v610 = vadd.f32 %v578, %v594
          %v611 = vadd.f32 %v579, %v595
          %v612 = vadd.f32 %v580, %v596
          %v613 = vadd.f32 %v581, %v597
          %v614 = vadd.f32 %v582, %v598
          %v615 = vadd.f32 %v583, %v599
          %v616 = vadd.f32 %v584, %v600
          %v617 = vadd.f32 %v585, %v601
          %v618 = vadd.f32 %v586, %v602
          %v619 = vadd.f32 %v587, %v603
          %v620 = vadd.f32 %v588, %v604
          %v621 = vadd.f32 %v589, %v605
          %v622 = vadd.f32 %v590, %v606
          %v623 = vadd.f32 %v591, %v607
          %v624 = vadd.f32 %v592, %v608
          %625 = vst [vmem:[#allocation2] sm:$0xff] %v609
          %626 = vst [vmem:[#allocation2 + $0x8] sm:$0xff] %v610
          %627 = vst [vmem:[#allocation2 + $0x10] sm:$0xff] %v611
          %628 = vst [vmem:[#allocation2 + $0x18] sm:$0xff] %v612
          %629 = vst [vmem:[#allocation2 + $0x20] sm:$0xff] %v613
          %630 = vst [vmem:[#allocation2 + $0x28] sm:$0xff] %v614
          %631 = vst [vmem:[#allocation2 + $0x30] sm:$0xff] %v615
          %632 = vst [vmem:[#allocation2 + $0x38] sm:$0xff] %v616
          %633 = vst [vmem:[#allocation2 + $0x40] sm:$0xff] %v617
          %634 = vst [vmem:[#allocation2 + $0x48] sm:$0xff] %v618
          %635 = vst [vmem:[#allocation2 + $0x50] sm:$0xff] %v619
          %636 = vst [vmem:[#allocation2 + $0x58] sm:$0xff] %v620
          %637 = vst [vmem:[#allocation2 + $0x60] sm:$0xff] %v621
          %638 = vst [vmem:[#allocation2 + $0x68] sm:$0xff] %v622
          %639 = vst [vmem:[#allocation2 + $0x70] sm:$0xff] %v623
          %640 = vst [vmem:[#allocation2 + $0x78] sm:$0xff] %v624
        $region90: #{tpu_custom_call.1} parent=73 // pred_fallthru
          _
        %p641 = scmp.eq.s32.totalorder %s25, 2
        // Predicated region
        $region91: #{tpu_custom_call.1} parent=73 // pred_check
          %p642 = pneg %p641
        $region92: #{tpu_custom_call.1} parent=73 // pred_check_branch
          %644 = sbr.rel (%p642) target = $region94
        $region93: #{tpu_custom_call.1} parent=73 // pred_region
          %v645 = vld [vmem:[#allocation2] sm:$0xff]
          %v646 = vld [vmem:[#allocation2 + $0x8] sm:$0xff]
          %v647 = vld [vmem:[#allocation2 + $0x10] sm:$0xff]
          %v648 = vld [vmem:[#allocation2 + $0x18] sm:$0xff]
          %v649 = vld [vmem:[#allocation2 + $0x20] sm:$0xff]
          %v650 = vld [vmem:[#allocation2 + $0x28] sm:$0xff]
          %v651 = vld [vmem:[#allocation2 + $0x30] sm:$0xff]
          %v652 = vld [vmem:[#allocation2 + $0x38] sm:$0xff]
          %v653 = vld [vmem:[#allocation2 + $0x40] sm:$0xff]
          %v654 = vld [vmem:[#allocation2 + $0x48] sm:$0xff]
          %v655 = vld [vmem:[#allocation2 + $0x50] sm:$0xff]
          %v656 = vld [vmem:[#allocation2 + $0x58] sm:$0xff]
          %v657 = vld [vmem:[#allocation2 + $0x60] sm:$0xff]
          %v658 = vld [vmem:[#allocation2 + $0x68] sm:$0xff]
          %v659 = vld [vmem:[#allocation2 + $0x70] sm:$0xff]
          %v660 = vld [vmem:[#allocation2 + $0x78] sm:$0xff]
          %v661 = vld [vmem:[%s323] sm:$0xff]
          %v662 = vld [vmem:[%s323 + $0x8] sm:$0xff]
          %v663 = vld [vmem:[%s323 + $0x10] sm:$0xff]
          %v664 = vld [vmem:[%s323 + $0x18] sm:$0xff]
          %v665 = vld [vmem:[%s323 + $0x20] sm:$0xff]
          %v666 = vld [vmem:[%s323 + $0x28] sm:$0xff]
          %v667 = vld [vmem:[%s323 + $0x30] sm:$0xff]
          %v668 = vld [vmem:[%s323 + $0x38] sm:$0xff]
          %v669 = vld [vmem:[%s323 + $0x40] sm:$0xff]
          %v670 = vld [vmem:[%s323 + $0x48] sm:$0xff]
          %v671 = vld [vmem:[%s323 + $0x50] sm:$0xff]
          %v672 = vld [vmem:[%s323 + $0x58] sm:$0xff]
          %v673 = vld [vmem:[%s323 + $0x60] sm:$0xff]
          %v674 = vld [vmem:[%s323 + $0x68] sm:$0xff]
          %v675 = vld [vmem:[%s323 + $0x70] sm:$0xff]
          %v676 = vld [vmem:[%s323 + $0x78] sm:$0xff]
          %678 = vset.pattern.permute.xlu0 0
          %679 = vperm.xlu0 %678, %v661
          %v680 = vpop.permute.xlu0 %679
          %683 = vset.pattern.permute.xlu0 0
          %684 = vperm.xlu0 %683, %v662
          %v685 = vpop.permute.xlu0 %684
          %688 = vset.pattern.permute.xlu0 0
          %689 = vperm.xlu0 %688, %v663
          %v690 = vpop.permute.xlu0 %689
          %693 = vset.pattern.permute.xlu0 0
          %694 = vperm.xlu0 %693, %v664
          %v695 = vpop.permute.xlu0 %694
          %698 = vset.pattern.permute.xlu0 0
          %699 = vperm.xlu0 %698, %v665
          %v700 = vpop.permute.xlu0 %699
          %703 = vset.pattern.permute.xlu0 0
          %704 = vperm.xlu0 %703, %v666
          %v705 = vpop.permute.xlu0 %704
          %708 = vset.pattern.permute.xlu0 0
          %709 = vperm.xlu0 %708, %v667
          %v710 = vpop.permute.xlu0 %709
          %713 = vset.pattern.permute.xlu0 0
          %714 = vperm.xlu0 %713, %v668
          %v715 = vpop.permute.xlu0 %714
          %718 = vset.pattern.permute.xlu0 0
          %719 = vperm.xlu0 %718, %v669
          %v720 = vpop.permute.xlu0 %719
          %723 = vset.pattern.permute.xlu0 0
          %724 = vperm.xlu0 %723, %v670
          %v725 = vpop.permute.xlu0 %724
          %728 = vset.pattern.permute.xlu0 0
          %729 = vperm.xlu0 %728, %v671
          %v730 = vpop.permute.xlu0 %729
          %733 = vset.pattern.permute.xlu0 0
          %734 = vperm.xlu0 %733, %v672
          %v735 = vpop.permute.xlu0 %734
          %738 = vset.pattern.permute.xlu0 0
          %739 = vperm.xlu0 %738, %v673
          %v740 = vpop.permute.xlu0 %739
          %743 = vset.pattern.permute.xlu0 0
          %744 = vperm.xlu0 %743, %v674
          %v745 = vpop.permute.xlu0 %744
          %748 = vset.pattern.permute.xlu0 0
          %749 = vperm.xlu0 %748, %v675
          %v750 = vpop.permute.xlu0 %749
          %753 = vset.pattern.permute.xlu0 0
          %754 = vperm.xlu0 %753, %v676
          %v755 = vpop.permute.xlu0 %754
          %v757 = vmul.f32 %v645, %v680
          %v758 = vmul.f32 %v646, %v685
          %v759 = vmul.f32 %v647, %v690
          %v760 = vmul.f32 %v648, %v695
          %v761 = vmul.f32 %v649, %v700
          %v762 = vmul.f32 %v650, %v705
          %v763 = vmul.f32 %v651, %v710
          %v764 = vmul.f32 %v652, %v715
          %v765 = vmul.f32 %v653, %v720
          %v766 = vmul.f32 %v654, %v725
          %v767 = vmul.f32 %v655, %v730
          %v768 = vmul.f32 %v656, %v735
          %v769 = vmul.f32 %v657, %v740
          %v770 = vmul.f32 %v658, %v745
          %v771 = vmul.f32 %v659, %v750
          %v772 = vmul.f32 %v660, %v755
          %v773 = vpack.c.bf16 %v758, %v757
          %v774 = vpack.c.bf16 %v760, %v759
          %v775 = vpack.c.bf16 %v762, %v761
          %v776 = vpack.c.bf16 %v764, %v763
          %v777 = vpack.c.bf16 %v766, %v765
          %v778 = vpack.c.bf16 %v768, %v767
          %v779 = vpack.c.bf16 %v770, %v769
          %v780 = vpack.c.bf16 %v772, %v771
          %v781 = vld [vmem:[%s3] sm:$0xf]
          %v782 = vld [vmem:[%s3 + $0x4] sm:$0xf]
          %v783 = vld [vmem:[%s3 + $0x8] sm:$0xf]
          %v784 = vld [vmem:[%s3 + $0xc] sm:$0xf]
          %v785 = vld [vmem:[%s3 + $0x10] sm:$0xf]
          %v786 = vld [vmem:[%s3 + $0x14] sm:$0xf]
          %v787 = vld [vmem:[%s3 + $0x18] sm:$0xf]
          %v788 = vld [vmem:[%s3 + $0x1c] sm:$0xf]
          %v789 = vld [vmem:[%s3 + $0x20] sm:$0xf]
          %v790 = vld [vmem:[%s3 + $0x24] sm:$0xf]
          %v791 = vld [vmem:[%s3 + $0x28] sm:$0xf]
          %v792 = vld [vmem:[%s3 + $0x2c] sm:$0xf]
          %v793 = vld [vmem:[%s3 + $0x30] sm:$0xf]
          %v794 = vld [vmem:[%s3 + $0x34] sm:$0xf]
          %v795 = vld [vmem:[%s3 + $0x38] sm:$0xf]
          %v796 = vld [vmem:[%s3 + $0x3c] sm:$0xf]
          %v797 = vld [vmem:[%s4] sm:$0x1]
          %v799 = vlaneseq
          %v800 = vshrl.u32 %v799, 7
          %v801 = vsub.s32 0, %v800
          %v802 = vrot.slane %v797, %v801
          %v820 = vunpack.c.l.b16 %v781
          %v821 = vunpack.c.l.b16 %v782
          %v822 = vunpack.c.l.b16 %v783
          %v823 = vunpack.c.l.b16 %v784
          %v824 = vunpack.c.l.b16 %v785
          %v825 = vunpack.c.l.b16 %v786
          %v826 = vunpack.c.l.b16 %v787
          %v827 = vunpack.c.l.b16 %v788
          %v828 = vunpack.c.l.b16 %v789
          %v829 = vunpack.c.l.b16 %v790
          %v830 = vunpack.c.l.b16 %v791
          %v831 = vunpack.c.l.b16 %v792
          %v832 = vunpack.c.l.b16 %v793
          %v833 = vunpack.c.l.b16 %v794
          %v834 = vunpack.c.l.b16 %v795
          %v835 = vunpack.c.l.b16 %v796
          %v836 = vpack.c.b16 %v821, %v820
          %v837 = vpack.c.b16 %v823, %v822
          %v838 = vpack.c.b16 %v825, %v824
          %v839 = vpack.c.b16 %v827, %v826
          %v840 = vpack.c.b16 %v829, %v828
          %v841 = vpack.c.b16 %v831, %v830
          %v842 = vpack.c.b16 %v833, %v832
          %v843 = vpack.c.b16 %v835, %v834
          %852 = vmatprep.subr.bf16.mxu0 0
          %853 = vmatpush1.bf16.msra.mxu0 %v843
          %854 = vmatprep.subr.bf16.mxu0 0
          %855 = vmatpush1.bf16.msra.mxu0 %v842
          %856 = vmatprep.subr.bf16.mxu0 0
          %857 = vmatpush1.bf16.msra.mxu0 %v841
          %858 = vmatprep.subr.bf16.mxu0 0
          %859 = vmatpush1.bf16.msra.mxu0 %v840
          %860 = vmatprep.subr.bf16.mxu0 0
          %861 = vmatpush1.bf16.msra.mxu0 %v839
          %862 = vmatprep.subr.bf16.mxu0 0
          %863 = vmatpush1.bf16.msra.mxu0 %v838
          %864 = vmatprep.subr.bf16.mxu0 0
          %865 = vmatpush1.bf16.msra.mxu0 %v837
          %866 = vmatprep.subr.bf16.mxu0 0
          %867 = vmatpush1.bf16.msra.mxu0 %v836
          %868 = vmatprep.subr.bf16.mxu0 0
          %869 = vmatpush2.bf16.msra.mxu0 0
          %870 = vmatprep.subr.bf16.mxu0 0
          %871 = vmatpush2.bf16.msra.mxu0 0
          %872 = vmatprep.subr.bf16.mxu0 0
          %873 = vmatpush2.bf16.msra.mxu0 0
          %874 = vmatprep.subr.bf16.mxu0 0
          %875 = vmatpush2.bf16.msra.mxu0 0
          %876 = vmatprep.subr.bf16.mxu0 0
          %877 = vmatpush2.bf16.msra.mxu0 0
          %878 = vmatprep.subr.bf16.mxu0 0
          %879 = vmatpush2.bf16.msra.mxu0 0
          %880 = vmatprep.subr.bf16.mxu0 0
          %881 = vmatpush2.bf16.msra.mxu0 0
          %882 = vmatprep.subr.bf16.mxu0 0
          %883 = vmatpush2.bf16.msra.mxu0 0
          %884 = vmatprep.mubr.bf16.mxu0 0
          %885 = vmatmul.mubr.bf16.gmra.mxu0 %v773
          %v886 = vpop.f32.mrf.mxu0
          %v887 = vadd.f32 %v802, %v886
          %v888 = vpop.f32.mrf.mxu0
          %v889 = vpop.f32.mrf.mxu0
          %v890 = vadd.f32 %v802, %v889
          %v891 = vpop.f32.mrf.mxu0
          %892 = vmatprep.mubr.bf16.mxu0 0
          %893 = vmatmul.mubr.bf16.gmra.mxu0 %v774
          %v894 = vpop.f32.mrf.mxu0
          %v895 = vadd.f32 %v802, %v894
          %v896 = vpop.f32.mrf.mxu0
          %v897 = vpop.f32.mrf.mxu0
          %v898 = vadd.f32 %v802, %v897
          %v899 = vpop.f32.mrf.mxu0
          %900 = vmatprep.mubr.bf16.mxu0 0
          %901 = vmatmul.mubr.bf16.gmra.mxu0 %v775
          %v902 = vpop.f32.mrf.mxu0
          %v903 = vadd.f32 %v802, %v902
          %v904 = vpop.f32.mrf.mxu0
          %v905 = vpop.f32.mrf.mxu0
          %v906 = vadd.f32 %v802, %v905
          %v907 = vpop.f32.mrf.mxu0
          %908 = vmatprep.mubr.bf16.mxu0 0
          %909 = vmatmul.mubr.bf16.gmra.mxu0 %v776
          %v910 = vpop.f32.mrf.mxu0
          %v911 = vadd.f32 %v802, %v910
          %v912 = vpop.f32.mrf.mxu0
          %v913 = vpop.f32.mrf.mxu0
          %v914 = vadd.f32 %v802, %v913
          %v915 = vpop.f32.mrf.mxu0
          %916 = vmatprep.mubr.bf16.mxu0 0
          %917 = vmatmul.mubr.bf16.gmra.mxu0 %v777
          %v918 = vpop.f32.mrf.mxu0
          %v919 = vadd.f32 %v802, %v918
          %v920 = vpop.f32.mrf.mxu0
          %v921 = vpop.f32.mrf.mxu0
          %v922 = vadd.f32 %v802, %v921
          %v923 = vpop.f32.mrf.mxu0
          %924 = vmatprep.mubr.bf16.mxu0 0
          %925 = vmatmul.mubr.bf16.gmra.mxu0 %v778
          %v926 = vpop.f32.mrf.mxu0
          %v927 = vadd.f32 %v802, %v926
          %v928 = vpop.f32.mrf.mxu0
          %v929 = vpop.f32.mrf.mxu0
          %v930 = vadd.f32 %v802, %v929
          %v931 = vpop.f32.mrf.mxu0
          %932 = vmatprep.mubr.bf16.mxu0 0
          %933 = vmatmul.mubr.bf16.gmra.mxu0 %v779
          %v934 = vpop.f32.mrf.mxu0
          %v935 = vadd.f32 %v802, %v934
          %v936 = vpop.f32.mrf.mxu0
          %v937 = vpop.f32.mrf.mxu0
          %v938 = vadd.f32 %v802, %v937
          %v939 = vpop.f32.mrf.mxu0
          %940 = vmatprep.mubr.bf16.mxu0 0
          %941 = vmatmul.mubr.bf16.gmra.mxu0 %v780
          %v942 = vpop.f32.mrf.mxu0
          %v943 = vadd.f32 %v802, %v942
          %v944 = vpop.f32.mrf.mxu0
          %v945 = vpop.f32.mrf.mxu0
          %v946 = vadd.f32 %v802, %v945
          %v947 = vpop.f32.mrf.mxu0
          %948 = vdwg.mxu0
          %949 = vst [vmem:[%s317] sm:$0xff] %v887
          %950 = vst [vmem:[%s317 + $0x8] sm:$0xff] %v890
          %951 = vst [vmem:[%s317 + $0x10] sm:$0xff] %v895
          %952 = vst [vmem:[%s317 + $0x18] sm:$0xff] %v898
          %953 = vst [vmem:[%s317 + $0x20] sm:$0xff] %v903
          %954 = vst [vmem:[%s317 + $0x28] sm:$0xff] %v906
          %955 = vst [vmem:[%s317 + $0x30] sm:$0xff] %v911
          %956 = vst [vmem:[%s317 + $0x38] sm:$0xff] %v914
          %957 = vst [vmem:[%s317 + $0x40] sm:$0xff] %v919
          %958 = vst [vmem:[%s317 + $0x48] sm:$0xff] %v922
          %959 = vst [vmem:[%s317 + $0x50] sm:$0xff] %v927
          %960 = vst [vmem:[%s317 + $0x58] sm:$0xff] %v930
          %961 = vst [vmem:[%s317 + $0x60] sm:$0xff] %v935
          %962 = vst [vmem:[%s317 + $0x68] sm:$0xff] %v938
          %963 = vst [vmem:[%s317 + $0x70] sm:$0xff] %v943
          %964 = vst [vmem:[%s317 + $0x78] sm:$0xff] %v946
        $region94: #{tpu_custom_call.1} parent=73 // pred_fallthru
          _
        %s965 = sand.u32 %s157, 1
        %s966 = scalar_lea.sflag [#allocation6], %s965
        %s967 = sand.u32 %s157, 1
        %s968 = smul.addr %s967, 128
        %s969 = scalar_lea.vmem [#allocation7], %s968
        // Predicated region
        $region95: #{tpu_custom_call.1} parent=73 // pred_check
          %p970 = pneg %p167
        $region96: #{tpu_custom_call.1} parent=73 // pred_check_branch
          %972 = sbr.rel (%p970) target = $region98
        $region97: #{tpu_custom_call.1} parent=73 // pred_region
          %s973 = smul.u32 16, %s24
          %s975 = ssub.s32 2048, 2048
          %976 = vsyncadd %s966, %s975
          %s977 = smul.addr %s973, 128
          %s978 = scalar_lea.hbm %s5, %s977
          %s979 = sshll.u32 %s969, 4
          %s980 = int_to_ptr.vmem [resolvable:$true] %s979
          %985 = dma.vmem_to_hbm [thread:$0]  %s980, 2048, %s978, %s966, 128, 128, 8
        $region98: #{tpu_custom_call.1} parent=73 // pred_fallthru
          _
      $region74: #{tpu_custom_call.1} parent=5 // pred_fallthru
        _
      %p986 = scmp.le.s32.totalorder 2, %s15
      // Predicated region
      $region99: #{tpu_custom_call.1} parent=5 // pred_check
        %p987 = pneg %p986
      $region100: #{tpu_custom_call.1} parent=5 // pred_check_branch
        %989 = sbr.rel (%p987) target = $region102
      $region101: #{tpu_custom_call.1} parent=5 // pred_region
        %s990 = ssub.s32 %s15, 2
        // Predicated region
        $region103: #{tpu_custom_call.1} parent=101 // pred_check
          %p991 = pneg %p173
        $region104: #{tpu_custom_call.1} parent=101 // pred_check_branch
          %993 = sbr.rel (%p991) target = $region106
        $region105: #{tpu_custom_call.1} parent=101 // pred_region
          %s994 = sand.u32 %s158, 1
          %s995 = scalar_lea.sflag [#allocation6], %s994
          %s996 = sand.u32 %s158, 1
          %s997 = smul.addr %s996, 128
          %s998 = scalar_lea.vmem [#allocation7], %s997
          %999 = dma.done %s995, 2048
        $region106: #{tpu_custom_call.1} parent=101 // pred_fallthru
          _
      $region102: #{tpu_custom_call.1} parent=5 // pred_fallthru
        _
    $region6: #{tpu_custom_call.1} parent=1 // loop_footer
      %s19 = sadd.s32 1, %s15
    $region7: #{tpu_custom_call.1} parent=1 // loop_footer_branch
      %14 = sbr.rel target = $region3
    $region8: #{tpu_custom_call.1} parent=1 // loop_exit
      _
    %1000 = vsyncpa [#allocation5], 1
    %s1001 = scalar_lea.sflag [#allocation5], 1
    %1002 = vsyncpa %s1001, 1
    %1003 = vsyncpa [#allocation6], 1
    %s1004 = scalar_lea.sflag [#allocation6], 1
    %1005 = vsyncpa %s1004, 1

</llo_original>
